<compile_context>
chip_gen: v5e
topology: v5e:2x2
jax: 0.10.0
libtpu: 0.0.40
codegen_flags: <defaults>
</compile_context>

<pallas_src>
import jax
import jax.numpy as jnp
from jax.experimental import pallas as pl
from jax.experimental.pallas import tpu as pltpu

_LANE = 128     # TPU lane width: hidden/output feature dims padded to this
_SUBLANE = 8    # f32 sublane granularity for the batch axis
_TB_BIG = 512   # batch tile for large (replay-buffer-sized) batches


def _round_up(n, m):
    return (n + m - 1) // m * m


def actor_kernel(x_ref, w1_ref, b1_ref, w2_ref, b2_ref, w3_ref, b3_ref, o_ref):
    # fc1 + ReLU
    h1 = jnp.dot(x_ref[...], w1_ref[...], preferred_element_type=jnp.float32)
    h1 = jnp.maximum(h1 + b1_ref[...], 0.0)
    # fc2 + ReLU
    h2 = jnp.dot(h1, w2_ref[...], preferred_element_type=jnp.float32)
    h2 = jnp.maximum(h2 + b2_ref[...], 0.0)
    # fc3 + tanh (tanh goes to the EUP slot -> effectively free next to MXU)
    h3 = jnp.dot(h2, w3_ref[...], preferred_element_type=jnp.float32)
    o_ref[...] = jnp.tanh(h3 + b3_ref[...]).astype(o_ref.dtype)


def _pad2(a, rows, cols):
    return jnp.pad(a, ((0, rows - a.shape[0]), (0, cols - a.shape[1])))


@jax.jit
def actor_forward(x, w1, b1, w2, b2, w3, b3):
    batch, s_dim = x.shape
    a_dim = w3.shape[1]

    # Batch tile: 512 rows for big batches; tiny batches collapse to one
    # 8-row-aligned tile so the grid is a single step.
    tb = _TB_BIG if batch >= _TB_BIG else _round_up(batch, _SUBLANE)
    padded_batch = _round_up(batch, tb)
    grid = (padded_batch // tb,)

    hp = _LANE   # padded hidden width (40 -> 128, 30 -> 128)
    ap = _LANE   # padded output width (a_dim -> 128) => lane-dense stores

    xp = jnp.pad(x, ((0, padded_batch - batch), (0, 0)))
    w1p = _pad2(w1, s_dim, hp)
    b1p = _pad2(b1, 1, hp)
    w2p = _pad2(w2, hp, hp)
    b2p = _pad2(b2, 1, hp)
    w3p = _pad2(w3, hp, ap)
    b3p = _pad2(b3, 1, ap)

    def resident(shape):
        # Same block index for every grid step -> stays VMEM-resident.
        return pl.BlockSpec(shape, lambda i: (0, 0))

    out = pl.pallas_call(
        actor_kernel,
        out_shape=jax.ShapeDtypeStruct((padded_batch, ap), jnp.float32),
        grid=grid,
        in_specs=[
            pl.BlockSpec((tb, s_dim), lambda i: (i, 0)),   # x: tiled over batch
            resident((s_dim, hp)),                         # w1
            resident((1, hp)),                             # b1
            resident((hp, hp)),                            # w2
            resident((1, hp)),                             # b2
            resident((hp, ap)),                            # w3
            resident((1, ap)),                             # b3
        ],
        out_specs=pl.BlockSpec((tb, ap), lambda i: (i, 0)),
        compiler_params=pltpu.CompilerParams(
            dimension_semantics=("parallel",)),            # megacore on v7x
    )(xp, w1p, b1p, w2p, b2p, w3p, b3p)

    # Strip batch padding and padded output lanes.
    return out[:batch, :a_dim]


def init_linear(key, fan_in, fan_out):
    # PyTorch-nn.Linear-style uniform(-1/sqrt(fan_in), 1/sqrt(fan_in)).
    kw, kb = jax.random.split(key)
    bound = 1.0 / jnp.sqrt(jnp.float32(fan_in))
    # Stored as (in, out) so the kernel can do x @ W without a transpose.
    w = jax.random.uniform(kw, (fan_in, fan_out), jnp.float32, -bound, bound)
    b = jax.random.uniform(kb, (1, fan_out), jnp.float32, -bound, bound)
    return w, b


def reference_forward(x, w1, b1, w2, b2, w3, b3):
    # Full-f32 reference (matches the kernel's f32 MXU accumulation path).
    hi = jax.lax.Precision.HIGHEST
    h1 = jax.nn.relu(jnp.dot(x, w1, precision=hi) + b1)
    h2 = jax.nn.relu(jnp.dot(h1, w2, precision=hi) + b2)
    return jnp.tanh(jnp.dot(h2, w3, precision=hi) + b3)


if __name__ == "__main__":
    s_dim, a_dim = 8, 4

    key = jax.random.PRNGKey(0)
    k_x, k1, k2, k3 = jax.random.split(key, 4)

    w1, b1 = init_linear(k1, s_dim, 40)
    w2, b2 = init_linear(k2, 40, 30)
    w3, b3 = init_linear(k3, 30, a_dim)

    # Small per-env-step case (batch=2): single 8-row tile, one grid step.
    x_small = jax.random.normal(k_x, (2, s_dim), jnp.float32)
    out_small = jax.block_until_ready(
        actor_forward(x_small, w1, b1, w2, b2, w3, b3))
    ref_small = reference_forward(x_small, w1, b1, w2, b2, w3, b3)
    assert out_small.shape == (2, a_dim)
    assert jnp.allclose(out_small, ref_small, atol=1e-4, rtol=1e-4), \
        "small-batch mismatch vs reference"

    # DDPG replay-buffer-sized batch exercising the batch grid (2 tiles of 512,
    # last one partially padded).
    x_big = jax.random.normal(k_x, (1000, s_dim), jnp.float32)
    out_big = jax.block_until_ready(
        actor_forward(x_big, w1, b1, w2, b2, w3, b3))
    ref_big = reference_forward(x_big, w1, b1, w2, b2, w3, b3)
    assert out_big.shape == (1000, a_dim)
    assert jnp.allclose(out_big, ref_big, atol=1e-4, rtol=1e-4), \
        "large-batch mismatch vs reference"

    print("KERNEL_OK")
</pallas_src>

<mosaic_0001>
module attributes {stable_mosaic.version = 11 : i64} {
  func.func @actor_kernel(%arg0: i32, %arg1: memref<8x8xf32, #tpu.memory_space<vmem>>, %arg2: memref<8x128xf32, #tpu.memory_space<vmem>>, %arg3: memref<1x128xf32, #tpu.memory_space<vmem>>, %arg4: memref<128x128xf32, #tpu.memory_space<vmem>>, %arg5: memref<1x128xf32, #tpu.memory_space<vmem>>, %arg6: memref<128x128xf32, #tpu.memory_space<vmem>>, %arg7: memref<1x128xf32, #tpu.memory_space<vmem>>, %arg8: memref<8x128xf32, #tpu.memory_space<vmem>>) attributes {dimension_semantics = [#tpu.dimension_semantics<parallel>], iteration_bounds = array<i64: 1>, scalar_prefetch = 0 : i64, scratch_operands = 0 : i64, tpu.core_type = #tpu.core_type<tc>, window_params = [{transform_indices = @transform_0, window_bounds = array<i64: 8, 8>}, {pipeline_mode = #tpu.pipeline_mode<synchronous>, transform_indices = @transform_1, window_bounds = array<i64: 8, 128>}, {pipeline_mode = #tpu.pipeline_mode<synchronous>, transform_indices = @transform_2, window_bounds = array<i64: 1, 128>}, {pipeline_mode = #tpu.pipeline_mode<synchronous>, transform_indices = @transform_3, window_bounds = array<i64: 128, 128>}, {pipeline_mode = #tpu.pipeline_mode<synchronous>, transform_indices = @transform_4, window_bounds = array<i64: 1, 128>}, {pipeline_mode = #tpu.pipeline_mode<synchronous>, transform_indices = @transform_5, window_bounds = array<i64: 128, 128>}, {pipeline_mode = #tpu.pipeline_mode<synchronous>, transform_indices = @transform_6, window_bounds = array<i64: 1, 128>}, {transform_indices = @transform_7, window_bounds = array<i64: 8, 128>}]} {
    %c0 = arith.constant 0 : index
    %c0_0 = arith.constant 0 : index
    %0 = vector.load %arg1[%c0, %c0_0] : memref<8x8xf32, #tpu.memory_space<vmem>>, vector<8x8xf32>
    %c0_1 = arith.constant 0 : index
    %c0_2 = arith.constant 0 : index
    %1 = vector.load %arg2[%c0_1, %c0_2] : memref<8x128xf32, #tpu.memory_space<vmem>>, vector<8x128xf32>
    %cst = arith.constant dense<0.000000e+00> : vector<8x128xf32>
    %2 = tpu.matmul %0, %1, %cst {dimension_numbers = #tpu.dot_dimension_numbers<[1], [0], [0], [1], [0, 0, 1, 1], [], []>} : vector<8x8xf32>, vector<8x128xf32>, vector<8x128xf32> -> vector<8x128xf32>
    %c0_3 = arith.constant 0 : index
    %c0_4 = arith.constant 0 : index
    %3 = vector.load %arg3[%c0_3, %c0_4] : memref<1x128xf32, #tpu.memory_space<vmem>>, vector<1x128xf32>
    %4 = vector.broadcast %3 : vector<1x128xf32> to vector<8x128xf32>
    %5 = arith.addf %2, %4 : vector<8x128xf32>
    %cst_5 = arith.constant 0.000000e+00 : f32
    %6 = vector.broadcast %cst_5 : f32 to vector<8x128xf32>
    %7 = arith.maximumf %5, %6 : vector<8x128xf32>
    %c0_6 = arith.constant 0 : index
    %c0_7 = arith.constant 0 : index
    %8 = vector.load %arg4[%c0_6, %c0_7] : memref<128x128xf32, #tpu.memory_space<vmem>>, vector<128x128xf32>
    %cst_8 = arith.constant dense<0.000000e+00> : vector<8x128xf32>
    %9 = tpu.matmul %7, %8, %cst_8 {dimension_numbers = #tpu.dot_dimension_numbers<[1], [0], [0], [1], [0, 0, 1, 1], [], []>} : vector<8x128xf32>, vector<128x128xf32>, vector<8x128xf32> -> vector<8x128xf32>
    %c0_9 = arith.constant 0 : index
    %c0_10 = arith.constant 0 : index
    %10 = vector.load %arg5[%c0_9, %c0_10] : memref<1x128xf32, #tpu.memory_space<vmem>>, vector<1x128xf32>
    %11 = vector.broadcast %10 : vector<1x128xf32> to vector<8x128xf32>
    %12 = arith.addf %9, %11 : vector<8x128xf32>
    %cst_11 = arith.constant 0.000000e+00 : f32
    %13 = vector.broadcast %cst_11 : f32 to vector<8x128xf32>
    %14 = arith.maximumf %12, %13 : vector<8x128xf32>
    %c0_12 = arith.constant 0 : index
    %c0_13 = arith.constant 0 : index
    %15 = vector.load %arg6[%c0_12, %c0_13] : memref<128x128xf32, #tpu.memory_space<vmem>>, vector<128x128xf32>
    %cst_14 = arith.constant dense<0.000000e+00> : vector<8x128xf32>
    %16 = tpu.matmul %14, %15, %cst_14 {dimension_numbers = #tpu.dot_dimension_numbers<[1], [0], [0], [1], [0, 0, 1, 1], [], []>} : vector<8x128xf32>, vector<128x128xf32>, vector<8x128xf32> -> vector<8x128xf32>
    %c0_15 = arith.constant 0 : index
    %c0_16 = arith.constant 0 : index
    %17 = vector.load %arg7[%c0_15, %c0_16] : memref<1x128xf32, #tpu.memory_space<vmem>>, vector<1x128xf32>
    %18 = vector.broadcast %17 : vector<1x128xf32> to vector<8x128xf32>
    %19 = arith.addf %16, %18 : vector<8x128xf32>
    %20 = math.tanh %19 : vector<8x128xf32>
    %c0_17 = arith.constant 0 : index
    %c0_18 = arith.constant 0 : index
    %21 = vector.load %arg8[%c0_17, %c0_18] : memref<8x128xf32, #tpu.memory_space<vmem>>, vector<8x128xf32>
    tpu.vector_store %arg8[%c0_17, %c0_18], %20 {strides = array<i32>} : memref<8x128xf32, #tpu.memory_space<vmem>>, vector<8x128xf32>,
    return
  }
  func.func @transform_0(%arg0: i32) -> (i32, i32) {
    %c0_i32 = arith.constant 0 : i32
    %c0_i32_0 = arith.constant 0 : i32
    return %arg0, %c0_i32 : i32, i32
  }
  func.func @transform_1(%arg0: i32) -> (i32, i32) {
    %c0_i32 = arith.constant 0 : i32
    %c0_i32_0 = arith.constant 0 : i32
    %c0_i32_1 = arith.constant 0 : i32
    return %c0_i32, %c0_i32_0 : i32, i32
  }
  func.func @transform_2(%arg0: i32) -> (i32, i32) {
    %c0_i32 = arith.constant 0 : i32
    %c0_i32_0 = arith.constant 0 : i32
    %c0_i32_1 = arith.constant 0 : i32
    return %c0_i32, %c0_i32_0 : i32, i32
  }
  func.func @transform_3(%arg0: i32) -> (i32, i32) {
    %c0_i32 = arith.constant 0 : i32
    %c0_i32_0 = arith.constant 0 : i32
    %c0_i32_1 = arith.constant 0 : i32
    return %c0_i32, %c0_i32_0 : i32, i32
  }
  func.func @transform_4(%arg0: i32) -> (i32, i32) {
    %c0_i32 = arith.constant 0 : i32
    %c0_i32_0 = arith.constant 0 : i32
    %c0_i32_1 = arith.constant 0 : i32
    return %c0_i32, %c0_i32_0 : i32, i32
  }
  func.func @transform_5(%arg0: i32) -> (i32, i32) {
    %c0_i32 = arith.constant 0 : i32
    %c0_i32_0 = arith.constant 0 : i32
    %c0_i32_1 = arith.constant 0 : i32
    return %c0_i32, %c0_i32_0 : i32, i32
  }
  func.func @transform_6(%arg0: i32) -> (i32, i32) {
    %c0_i32 = arith.constant 0 : i32
    %c0_i32_0 = arith.constant 0 : i32
    %c0_i32_1 = arith.constant 0 : i32
    return %c0_i32, %c0_i32_0 : i32, i32
  }
  func.func @transform_7(%arg0: i32) -> (i32, i32) {
    %c0_i32 = arith.constant 0 : i32
    %c0_i32_0 = arith.constant 0 : i32
    return %arg0, %c0_i32 : i32, i32
  }
}

</mosaic_0001>

<llo_original>
// kernel: actor_forward.1
$region0: #{actor_forward.1}
  #allocation0 [shape = 'u32[]', space=smem, size = 0x4, offset = 0x4, fixed_abs, tag = 'smem constant byte address 0x4 - core index']
  #allocation1 [shape = 'u32[72,128]{1,0:T(1,128)}', space=vmem, size = 0x9000, scoped, tag = 'internal scratch']
  %s0 = inlined_call_operand.vmem [shape: f32[8,8], index: 0, kind: input, shape index: {}]
  %s1 = inlined_call_operand.vmem [shape: f32[8,128], index: 1, kind: input, shape index: {}]
  %s2 = inlined_call_operand.vmem [shape: f32[1,128], index: 2, kind: input, shape index: {}]
  %s3 = inlined_call_operand.vmem [shape: f32[128,128], index: 3, kind: input, shape index: {}]
  %s4 = inlined_call_operand.vmem [shape: f32[1,128], index: 4, kind: input, shape index: {}]
  %s5 = inlined_call_operand.vmem [shape: f32[128,128], index: 5, kind: input, shape index: {}]
  %s6 = inlined_call_operand.vmem [shape: f32[1,128], index: 6, kind: input, shape index: {}]
  %s7 = inlined_call_operand.vmem [shape: f32[8,128], index: 7, kind: output, shape index: {}]
  %s8 = sld [smem:[#allocation0]]
  $region38: #{actor_forward.1} parent=0
    _
  %s10 = ssub.s32 1, %s8
  %s11 = scalar_select 0, %s10, %s8
  // Predicated region
  $region2: #{actor_forward.1} parent=0 // pred_check
    _
  $region3: #{actor_forward.1} parent=0 // pred_check_branch
    %13 = sbr.rel (0) target = $region5
  $region4: #{actor_forward.1} parent=0 // pred_region
    _
  $region5: #{actor_forward.1} parent=0 // pred_fallthru
    _
  // Predicated region
  $region6: #{actor_forward.1} parent=0 // pred_check
    _
  $region7: #{actor_forward.1} parent=0 // pred_check_branch
    %15 = sbr.rel (0) target = $region9
  $region8: #{actor_forward.1} parent=0 // pred_region
    _
  $region9: #{actor_forward.1} parent=0 // pred_fallthru
    _
  // Predicated region
  $region10: #{actor_forward.1} parent=0 // pred_check
    _
  $region11: #{actor_forward.1} parent=0 // pred_check_branch
    %17 = sbr.rel (0) target = $region13
  $region12: #{actor_forward.1} parent=0 // pred_region
    _
  $region13: #{actor_forward.1} parent=0 // pred_fallthru
    _
  // Predicated region
  $region14: #{actor_forward.1} parent=0 // pred_check
    _
  $region15: #{actor_forward.1} parent=0 // pred_check_branch
    %19 = sbr.rel (0) target = $region17
  $region16: #{actor_forward.1} parent=0 // pred_region
    _
  $region17: #{actor_forward.1} parent=0 // pred_fallthru
    _
  // Predicated region
  $region18: #{actor_forward.1} parent=0 // pred_check
    _
  $region19: #{actor_forward.1} parent=0 // pred_check_branch
    %21 = sbr.rel (0) target = $region21
  $region20: #{actor_forward.1} parent=0 // pred_region
    _
  $region21: #{actor_forward.1} parent=0 // pred_fallthru
    _
  // Predicated region
  $region22: #{actor_forward.1} parent=0 // pred_check
    _
  $region23: #{actor_forward.1} parent=0 // pred_check_branch
    %23 = sbr.rel (0) target = $region25
  $region24: #{actor_forward.1} parent=0 // pred_region
    _
  $region25: #{actor_forward.1} parent=0 // pred_fallthru
    _
  // Predicated region
  $region26: #{actor_forward.1} parent=0 // pred_check
    _
  $region27: #{actor_forward.1} parent=0 // pred_check_branch
    %25 = sbr.rel (0) target = $region29
  $region28: #{actor_forward.1} parent=0 // pred_region
    _
  $region29: #{actor_forward.1} parent=0 // pred_fallthru
    _
  %v26 = vld [vmem:[%s0] sm:$0xff]
  %v27 = vld [vmem:[%s1] sm:$0xff]
  %v28 = vld [vmem:[%s2] sm:$0x1]
  %v30 = vperm.slane %v28, 0
  %vm32 = vcmask 64512
  %v34 = vsel %vm32, %v26, 0
  %36 = vmatpush.msra.mxu0 0.0
  %37 = vmatpush.msra.mxu0 0.0
  %38 = vmatpush.msra.mxu0 0.0
  %39 = vmatpush.msra.mxu0 0.0
  %40 = vmatpush.msra.mxu0 0.0
  %41 = vmatpush.msra.mxu0 0.0
  %42 = vmatpush.msra.mxu0 0.0
  %43 = vmatpush.msra.mxu0 0.0
  %44 = vmatpush.msra.mxu0 0.0
  %45 = vmatpush.msra.mxu0 0.0
  %46 = vmatpush.msra.mxu0 0.0
  %47 = vmatpush.msra.mxu0 0.0
  %48 = vmatpush.msra.mxu0 0.0
  %49 = vmatpush.msra.mxu0 0.0
  %50 = vmatpush.msra.mxu0 0.0
  %51 = vmatpush.msra.mxu0 %v27
  %52 = vmatmul.f32.gmra.mxu0 %v34
  %v53 = vpop.f32.mrf.mxu0
  %v54 = vadd.f32 %v30, %v53
  %55 = vdwg.mxu0
  %v56 = vmax.f32 %v54, 0.0
  %v57 = vld [vmem:[%s3] sm:$0xff]
  %v58 = vld [vmem:[%s3 + $0x8] sm:$0xff]
  %v59 = vld [vmem:[%s3 + $0x10] sm:$0xff]
  %v60 = vld [vmem:[%s3 + $0x18] sm:$0xff]
  %v61 = vld [vmem:[%s3 + $0x20] sm:$0xff]
  %v62 = vld [vmem:[%s3 + $0x28] sm:$0xff]
  %v63 = vld [vmem:[%s3 + $0x30] sm:$0xff]
  %v64 = vld [vmem:[%s3 + $0x38] sm:$0xff]
  %v65 = vld [vmem:[%s3 + $0x40] sm:$0xff]
  %v66 = vld [vmem:[%s3 + $0x48] sm:$0xff]
  %v67 = vld [vmem:[%s3 + $0x50] sm:$0xff]
  %v68 = vld [vmem:[%s3 + $0x58] sm:$0xff]
  %v69 = vld [vmem:[%s3 + $0x60] sm:$0xff]
  %v70 = vld [vmem:[%s3 + $0x68] sm:$0xff]
  %v71 = vld [vmem:[%s3 + $0x70] sm:$0xff]
  %v72 = vld [vmem:[%s3 + $0x78] sm:$0xff]
  %v73 = vld [vmem:[%s4] sm:$0x1]
  %v75 = vperm.slane %v73, 0
  %77 = vmatpush.msra.mxu0 %v72
  %78 = vmatpush.msra.mxu0 %v71
  %79 = vmatpush.msra.mxu0 %v70
  %80 = vmatpush.msra.mxu0 %v69
  %81 = vmatpush.msra.mxu0 %v68
  %82 = vmatpush.msra.mxu0 %v67
  %83 = vmatpush.msra.mxu0 %v66
  %84 = vmatpush.msra.mxu0 %v65
  %85 = vmatpush.msra.mxu0 %v64
  %86 = vmatpush.msra.mxu0 %v63
  %87 = vmatpush.msra.mxu0 %v62
  %88 = vmatpush.msra.mxu0 %v61
  %89 = vmatpush.msra.mxu0 %v60
  %90 = vmatpush.msra.mxu0 %v59
  %91 = vmatpush.msra.mxu0 %v58
  %92 = vmatpush.msra.mxu0 %v57
  %93 = vmatmul.f32.gmra.mxu0 %v56
  %v94 = vpop.f32.mrf.mxu0
  %v95 = vadd.f32 %v75, %v94
  %96 = vdwg.mxu0
  %v97 = vmax.f32 %v95, 0.0
  %v98 = vld [vmem:[%s5] sm:$0xff]
  %v99 = vld [vmem:[%s5 + $0x8] sm:$0xff]
  %v100 = vld [vmem:[%s5 + $0x10] sm:$0xff]
  %v101 = vld [vmem:[%s5 + $0x18] sm:$0xff]
  %v102 = vld [vmem:[%s5 + $0x20] sm:$0xff]
  %v103 = vld [vmem:[%s5 + $0x28] sm:$0xff]
  %v104 = vld [vmem:[%s5 + $0x30] sm:$0xff]
  %v105 = vld [vmem:[%s5 + $0x38] sm:$0xff]
  %v106 = vld [vmem:[%s5 + $0x40] sm:$0xff]
  %v107 = vld [vmem:[%s5 + $0x48] sm:$0xff]
  %v108 = vld [vmem:[%s5 + $0x50] sm:$0xff]
  %v109 = vld [vmem:[%s5 + $0x58] sm:$0xff]
  %v110 = vld [vmem:[%s5 + $0x60] sm:$0xff]
  %v111 = vld [vmem:[%s5 + $0x68] sm:$0xff]
  %v112 = vld [vmem:[%s5 + $0x70] sm:$0xff]
  %v113 = vld [vmem:[%s5 + $0x78] sm:$0xff]
  %v114 = vld [vmem:[%s6] sm:$0x1]
  %v116 = vperm.slane %v114, 0
  %118 = vmatpush.msra.mxu0 %v113
  %119 = vmatpush.msra.mxu0 %v112
  %120 = vmatpush.msra.mxu0 %v111
  %121 = vmatpush.msra.mxu0 %v110
  %122 = vmatpush.msra.mxu0 %v109
  %123 = vmatpush.msra.mxu0 %v108
  %124 = vmatpush.msra.mxu0 %v107
  %125 = vmatpush.msra.mxu0 %v106
  %126 = vmatpush.msra.mxu0 %v105
  %127 = vmatpush.msra.mxu0 %v104
  %128 = vmatpush.msra.mxu0 %v103
  %129 = vmatpush.msra.mxu0 %v102
  %130 = vmatpush.msra.mxu0 %v101
  %131 = vmatpush.msra.mxu0 %v100
  %132 = vmatpush.msra.mxu0 %v99
  %133 = vmatpush.msra.mxu0 %v98
  %134 = vmatmul.f32.gmra.mxu0 %v97
  %v135 = vpop.f32.mrf.mxu0
  %v136 = vadd.f32 %v116, %v135
  %137 = vdwg.mxu0
  %v138 = vtanh.pop %v136
  %139 = vst [vmem:[%s7] sm:$0xff] %v138
  // Predicated region
  $region30: #{actor_forward.1} parent=0 // pred_check
    _
  $region31: #{actor_forward.1} parent=0 // pred_check_branch
    %141 = sbr.rel (0) target = $region33
  $region32: #{actor_forward.1} parent=0 // pred_region
    _
  $region33: #{actor_forward.1} parent=0 // pred_fallthru
    _
  // Predicated region
  $region34: #{actor_forward.1} parent=0 // pred_check
    _
  $region35: #{actor_forward.1} parent=0 // pred_check_branch
    %143 = sbr.rel (0) target = $region37
  $region36: #{actor_forward.1} parent=0 // pred_region
    _
  $region37: #{actor_forward.1} parent=0 // pred_fallthru
    _

</llo_original>
